<compile_context>
chip_gen: v6e
topology: v6e:2x2x1
jax: 0.10.0
libtpu: 0.0.40
codegen_flags: <defaults>
</compile_context>

<pallas_src>
import jax
import jax.numpy as jnp
from jax import lax
from jax.experimental import pallas as pl
from jax.experimental.pallas import tpu as pltpu


def _mbstd_partial_kernel(x_ref, o_ref):
    """Streaming minibatch-std partial reduction.

    x_ref: (N, F, TS, LANE) input tile.
    o_ref: (1, F, LANE) lane-dense partial-sum block; one block per outer
           ("parallel") grid index, resident across the inner ("arbitrary")
           reduction axis.
    """
    j = pl.program_id(1)

    @pl.when(j == 0)
    def _init():
        o_ref[...] = jnp.zeros_like(o_ref)

    n = x_ref.shape[0]                      # static batch size
    acc_shape = x_ref.shape[1:]             # (F, TS, LANE)

    # Accumulate sum / sum-of-squares over the batch one sample at a time:
    # no (N, F, TS, LANE) f32 temporaries, per-sample upcast, live set stays
    # within the vreg file for F*TS <= 128.
    def body(i, carry):
        s, sq = carry
        xi = x_ref[i].astype(jnp.float32)
        return s + xi, sq + xi * xi

    zeros = jnp.zeros(acc_shape, jnp.float32)
    s, sq = lax.fori_loop(0, n, body, (zeros, zeros), unroll=(n <= 8))

    inv_n = jnp.float32(1.0 / n)
    mean = s * inv_n
    var = jnp.maximum(sq * inv_n - mean * mean, 0.0)   # guard tiny negative rounding
    std = jnp.sqrt(var + 1e-8)                         # EUP
    # Reduce only the sublane (TS) axis here; the tiny final lane/outer reduce
    # happens in the wrapper so every in-kernel store stays lane-dense.
    o_ref[...] += jnp.sum(std, axis=1)[None]           # (1, F, LANE)


def _round_up(a, b):
    return (a + b - 1) // b * b


def _pick_tile(cands, s):
    """Pick the largest tile whose tile-count best supports 2-core + pipelining."""
    cands = sorted(set(cands))
    for pred in (
        lambda nt: nt >= 4 and nt % 2 == 0,   # 2 outer (v7x cores) x >=2 inner steps
        lambda nt: nt >= 2 and nt % 2 == 0,   # 2 outer
        lambda nt: nt >= 2,                   # at least 2 pipelined steps
        lambda nt: True,
    ):
        ok = [t for t in cands if pred(s // t)]
        if ok:
            return max(ok)
    return max(cands)


def _plan_tiling(N, F_, L, dtype_bytes):
    """Return (S, LANE, TS, n_outer, n_inner, n_pad)."""
    LANE = 128
    sub = {4: 8, 2: 16, 1: 32}.get(dtype_bytes, 8)     # sublane packing per dtype
    S0 = -(-L // LANE)                                  # ceil(L / 128)

    # Byte-budgeted tile cap: 2x (double-buffer) input tile + 2x f32 accumulators
    # per TS-row must stay well under v5e's 16 MiB default scoped VMEM.
    budget = 12 * 1024 * 1024
    per_ts = 2 * N * F_ * LANE * dtype_bytes + 2 * F_ * LANE * 4
    ts_budget = max(sub, (budget // per_ts) // sub * sub)
    # Keep F*TS modest so the two accumulator carries (mostly) stay in vregs.
    ts_vreg = max(sub, (128 // max(F_, 1)) // sub * sub)
    ts_cap = min(ts_budget, ts_vreg)

    cands = [t for t in range(sub, S0 + 1, sub) if S0 % t == 0 and t <= ts_cap]
    if S0 <= ts_cap:
        cands.append(S0)            # full-dim block is always layout-legal
    if cands:
        TS = _pick_tile(cands, S0)
        S = S0
    else:
        # No clean divisor: pad the element axis; the pad contribution
        # (n_pad * sqrt(1e-8)) is subtracted in the wrapper's final combine.
        TS = max(sub, min(ts_cap, _round_up(-(-S0 // 4), sub)))
        S = _round_up(S0, TS)

    n_tiles = S // TS
    n_outer = 2 if (n_tiles >= 2 and n_tiles % 2 == 0) else 1
    n_inner = n_tiles // n_outer
    n_pad = S * LANE - L
    return S, LANE, TS, n_outer, n_inner, n_pad


def minibatch_std_layer(x, group_size=4, num_channels=1):
    """Pallas implementation of MinibatchStdLayer.forward (G = N, as in reference)."""
    del group_size  # reference forward uses G = N; group_size is unused there.
    N, C, H, W = x.shape
    F_ = num_channels
    assert C % F_ == 0, "C must be divisible by num_channels"
    c = C // F_
    L = c * H * W  # number of elements averaged per feature group
    dtype_bytes = jnp.dtype(x.dtype).itemsize

    S, LANE, TS, n_outer, n_inner, n_pad = _plan_tiling(N, F_, L, dtype_bytes)

    # Lane-dense (N, F, S, 128) view; zero-pad the element axis only when needed.
    if n_pad:
        xf = jnp.pad(x.reshape(N, F_, L), ((0, 0), (0, 0), (0, n_pad)))
        xr = xf.reshape(N, F_, S, LANE)
    else:
        xr = x.reshape(N, F_, S, LANE)

    elems = N * F_ * S * LANE
    cost = pl.CostEstimate(
        flops=6 * elems,
        transcendentals=F_ * S * LANE,
        bytes_accessed=elems * dtype_bytes + n_outer * F_ * LANE * 4,
    )

    partial = pl.pallas_call(
        _mbstd_partial_kernel,
        out_shape=jax.ShapeDtypeStruct((n_outer, F_, LANE), jnp.float32),
        grid=(n_outer, n_inner),
        in_specs=[
            pl.BlockSpec(
                (N, F_, TS, LANE),
                lambda i, j: (0, 0, i * n_inner + j, 0),
            )
        ],
        out_specs=pl.BlockSpec((1, F_, LANE), lambda i, j: (i, 0, 0)),
        compiler_params=pltpu.CompilerParams(
            # Outer axis shards across TensorCores on v7x; inner is the
            # resident-accumulator reduction axis.
            dimension_semantics=("parallel", "arbitrary"),
        ),
        cost_estimate=cost,
    )(xr)

    # Final tiny combine in the wrapper: sum per-core / per-lane partials,
    # remove the contribution of padded zeros (std == sqrt(1e-8) each).
    total = partial.sum(axis=(0, 2))                               # (F,)
    if n_pad:
        total = total - jnp.float32(n_pad) * jnp.sqrt(jnp.float32(1e-8))
    stat = total / jnp.float32(L)
    y = jnp.broadcast_to(stat.reshape(1, F_, 1, 1), (N, F_, H, W)).astype(x.dtype)
    # TODO(synk): verify in HLO that this broadcast + concatenate fuses into the
    # consumer conv; if it stays a standalone copy it dominates this stage's HBM traffic.
    return jnp.concatenate([x, y], axis=1)


def _reference(x, num_channels=1):
    """Pure-JAX reference mirroring the PyTorch forward exactly."""
    N, C, H, W = x.shape
    G = N
    F_ = num_channels
    c = C // F_
    y = x.reshape(G, -1, F_, c, H, W)
    y = y - y.mean(axis=0)
    y = jnp.square(y).mean(axis=0)
    y = jnp.sqrt(y + 1e-8)
    y = y.mean(axis=(2, 3, 4))
    y = y.reshape(-1, F_, 1, 1)
    y = jnp.tile(y, (G, 1, H, W))
    return jnp.concatenate([x, y], axis=1)


if __name__ == "__main__":
    key = jax.random.PRNGKey(0)
    N, C, H, W = 2, 4, 16, 16
    num_channels = 1
    x = jax.random.normal(key, (N, C, H, W), dtype=jnp.float32)

    out = minibatch_std_layer(x, group_size=4, num_channels=num_channels)
    out = jax.block_until_ready(out)

    ref = _reference(x, num_channels=num_channels)
    assert out.shape == (N, C + num_channels, H, W)
    assert jnp.allclose(out, ref, atol=1e-5, rtol=1e-5)

    print("KERNEL_OK")
</pallas_src>

<mosaic_0001>
module attributes {stable_mosaic.version = 11 : i64} {
  func.func @_mbstd_partial_kernel(%arg0: i32, %arg1: i32, %arg2: memref<2x1x8x128xf32, #tpu.memory_space<vmem>>, %arg3: memref<1x1x128xf32, #tpu.memory_space<vmem>>) attributes {dimension_semantics = [#tpu.dimension_semantics<parallel>, #tpu.dimension_semantics<arbitrary>], iteration_bounds = array<i64: 1, 1>, scalar_prefetch = 0 : i64, scratch_operands = 0 : i64, tpu.core_type = #tpu.core_type<tc>, window_params = [{transform_indices = @transform_0, window_bounds = array<i64: 2, 1, 8, 128>}, {transform_indices = @transform_1, window_bounds = array<i64: 1, 1, 128>}]} {
    %c0_i32 = arith.constant 0 : i32
    %0 = arith.cmpi eq, %arg1, %c0_i32 : i32
    %1 = arith.extui %0 : i1 to i32
    %c0_i32_0 = arith.constant 0 : i32
    %2 = arith.cmpi ne, %1, %c0_i32_0 : i32
    scf.if %2 {
      %cst_18 = arith.constant 0.000000e+00 : f32
      %32 = vector.broadcast %cst_18 : f32 to vector<1x1x128xf32>
      %c0_19 = arith.constant 0 : index
      %c0_20 = arith.constant 0 : index
      %c0_21 = arith.constant 0 : index
      %33 = vector.load %arg3[%c0_19, %c0_20, %c0_21] : memref<1x1x128xf32, #tpu.memory_space<vmem>>, vector<1x1x128xf32>
      tpu.vector_store %arg3[%c0_19, %c0_20, %c0_21], %32 {strides = array<i32>} : memref<1x1x128xf32, #tpu.memory_space<vmem>>, vector<1x1x128xf32>,
    } else {
    }
    %cst = arith.constant 0.000000e+00 : f32
    %3 = vector.broadcast %cst : f32 to vector<1x8x128xf32>
    %c0_i32_1 = arith.constant 0 : i32
    %4 = arith.index_cast %c0_i32_1 : i32 to index
    %c0 = arith.constant 0 : index
    %c0_2 = arith.constant 0 : index
    %c0_3 = arith.constant 0 : index
    %5 = vector.load %arg2[%4, %c0, %c0_2, %c0_3] : memref<2x1x8x128xf32, #tpu.memory_space<vmem>>, vector<1x1x8x128xf32>
    %6 = vector.shape_cast %5 : vector<1x1x8x128xf32> to vector<1x8x128xf32>
    %7 = arith.addf %3, %6 : vector<1x8x128xf32>
    %8 = arith.mulf %6, %6 : vector<1x8x128xf32>
    %9 = arith.addf %3, %8 : vector<1x8x128xf32>
    %c1_i32 = arith.constant 1 : i32
    %10 = arith.index_cast %c1_i32 : i32 to index
    %c0_4 = arith.constant 0 : index
    %c0_5 = arith.constant 0 : index
    %c0_6 = arith.constant 0 : index
    %11 = vector.load %arg2[%10, %c0_4, %c0_5, %c0_6] : memref<2x1x8x128xf32, #tpu.memory_space<vmem>>, vector<1x1x8x128xf32>
    %12 = vector.shape_cast %11 : vector<1x1x8x128xf32> to vector<1x8x128xf32>
    %13 = arith.addf %7, %12 : vector<1x8x128xf32>
    %14 = arith.mulf %12, %12 : vector<1x8x128xf32>
    %15 = arith.addf %9, %14 : vector<1x8x128xf32>
    %c2_i32 = arith.constant 2 : i32
    %cst_7 = arith.constant 5.000000e-01 : f32
    %16 = vector.broadcast %cst_7 : f32 to vector<1x8x128xf32>
    %17 = arith.mulf %13, %16 : vector<1x8x128xf32>
    %cst_8 = arith.constant 5.000000e-01 : f32
    %18 = vector.broadcast %cst_8 : f32 to vector<1x8x128xf32>
    %19 = arith.mulf %15, %18 : vector<1x8x128xf32>
    %20 = arith.mulf %17, %17 : vector<1x8x128xf32>
    %21 = arith.subf %19, %20 : vector<1x8x128xf32>
    %cst_9 = arith.constant 0.000000e+00 : f32
    %22 = vector.broadcast %cst_9 : f32 to vector<1x8x128xf32>
    %23 = arith.maximumf %21, %22 : vector<1x8x128xf32>
    %cst_10 = arith.constant 9.99999993E-9 : f32
    %24 = vector.broadcast %cst_10 : f32 to vector<1x8x128xf32>
    %25 = arith.addf %23, %24 : vector<1x8x128xf32>
    %26 = math.sqrt %25 : vector<1x8x128xf32>
    %c0_11 = arith.constant 0 : index
    %c0_12 = arith.constant 0 : index
    %c0_13 = arith.constant 0 : index
    %27 = vector.load %arg3[%c0_11, %c0_12, %c0_13] : memref<1x1x128xf32, #tpu.memory_space<vmem>>, vector<1x1x128xf32>
    %cst_14 = arith.constant dense<0.000000e+00> : vector<1x128xf32>
    %28 = vector.multi_reduction <add>, %26, %cst_14 [1] : vector<1x8x128xf32> to vector<1x128xf32>
    %29 = vector.shape_cast %28 : vector<1x128xf32> to vector<1x1x128xf32>
    %30 = arith.addf %27, %29 : vector<1x1x128xf32>
    %c0_15 = arith.constant 0 : index
    %c0_16 = arith.constant 0 : index
    %c0_17 = arith.constant 0 : index
    %31 = vector.load %arg3[%c0_15, %c0_16, %c0_17] : memref<1x1x128xf32, #tpu.memory_space<vmem>>, vector<1x1x128xf32>
    tpu.vector_store %arg3[%c0_15, %c0_16, %c0_17], %30 {strides = array<i32>} : memref<1x1x128xf32, #tpu.memory_space<vmem>>, vector<1x1x128xf32>,
    return
  }
  func.func @transform_0(%arg0: i32, %arg1: i32) -> (i32, i32, i32, i32) {
    %c1_i32 = arith.constant 1 : i32
    %0 = arith.muli %arg0, %c1_i32 : i32
    %1 = arith.addi %0, %arg1 : i32
    %c0_i32 = arith.constant 0 : i32
    %c0_i32_0 = arith.constant 0 : i32
    %c0_i32_1 = arith.constant 0 : i32
    %c0_i32_2 = arith.constant 0 : i32
    return %c0_i32, %c0_i32_0, %1, %c0_i32_1 : i32, i32, i32, i32
  }
  func.func @transform_1(%arg0: i32, %arg1: i32) -> (i32, i32, i32) {
    %c0_i32 = arith.constant 0 : i32
    %c0_i32_0 = arith.constant 0 : i32
    %c0_i32_1 = arith.constant 0 : i32
    return %arg0, %c0_i32, %c0_i32_0 : i32, i32, i32
  }
}

</mosaic_0001>

<llo_original>
// kernel: tpu_custom_call.1
$region0: #{tpu_custom_call.1}
  #allocation0 [shape = 'u32[]', space=smem, size = 0x4, offset = 0x4, fixed_abs, tag = 'smem constant byte address 0x4 - core index']
  #allocation1 [shape = 'u32[144,128]{1,0:T(1,128)}', space=vmem, size = 0x12000, scoped, tag = 'internal scratch']
  %s0 = inlined_call_operand.hbm [shape: f32[2,1,8,128], index: 0, kind: input, shape index: {}]
  %s1 = inlined_call_operand.hbm [shape: f32[1,1,128], index: 1, kind: output, shape index: {}]
  %s2 = sld [smem:[#allocation0]]
  $region22: #{tpu_custom_call.1} parent=0
    _
  %s4 = ssub.s32 1, %s2
  %s5 = scalar_select 0, %s4, %s2
  $region1: #{tpu_custom_call.1} parent=0
    #allocation2 [shape = 'u8[8192]{0}', space=vmem, size = 0x2000, scoped, tag = 'input window, operand 0, single buffered']
    #allocation3 [shape = 's32[1]{0}', space=sflag, size = 0x4, scoped, tag = 'scoped memory for tpu_custom_call.1']
    #allocation4 [shape = 's32[1]{0}', space=sflag, size = 0x4, scoped, tag = 'scoped memory for tpu_custom_call.1']
    #allocation5 [shape = 'u8[512]{0}', space=vmem, size = 0x400, scoped, tag = 'output window, operand 0, single buffered']
    %6 = vsyncpa [#allocation3], 0
    %7 = vsyncpa [#allocation4], 0
    // Predicated region
    $region2: #{tpu_custom_call.1} parent=1 // pred_check
      _
    $region3: #{tpu_custom_call.1} parent=1 // pred_check_branch
      %9 = sbr.rel (0) target = $region5
    $region4: #{tpu_custom_call.1} parent=1 // pred_region
      %s10 = sadd.s32 0, 0
      %s12 = ssub.s32 256, 256
      %13 = vsyncadd [#allocation3], %s12
      %s14 = smul.addr %s10, 128
      %s15 = scalar_lea.hbm %s0, %s14
      %s16 = sshll.u32 [#allocation2], 4
      %s17 = int_to_ptr.vmem [resolvable:$true] %s16
      %22 = dma.hbm_to_vmem [thread:$0]  %s15, 256, %s17, [#allocation3], 128, 128, 8
    $region5: #{tpu_custom_call.1} parent=1 // pred_fallthru
      _
    // Predicated region
    $region6: #{tpu_custom_call.1} parent=1 // pred_check
      _
    $region7: #{tpu_custom_call.1} parent=1 // pred_check_branch
      %24 = sbr.rel (0) target = $region9
    $region8: #{tpu_custom_call.1} parent=1 // pred_region
      %25 = dma.done [#allocation3], 256
    $region9: #{tpu_custom_call.1} parent=1 // pred_fallthru
      _
    %s26 = sadd.s32 0, 0
    %p27 = scmp.eq.s32.totalorder 0, 0
    // Predicated region
    $region10: #{tpu_custom_call.1} parent=1 // pred_check
      %p28 = pneg %p27
    $region11: #{tpu_custom_call.1} parent=1 // pred_check_branch
      %30 = sbr.rel (%p28) target = $region13
    $region12: #{tpu_custom_call.1} parent=1 // pred_region
      %31 = vst [vmem:[#allocation5] sm:$0x1] 0.0
    $region13: #{tpu_custom_call.1} parent=1 // pred_fallthru
      _
    %v32 = vld [vmem:[#allocation2] sm:$0xff]
    %v33 = vadd.f32 %v32, 0.0
    %v34 = vmul.f32 %v32, %v32
    %v35 = vadd.f32 %v34, 0.0
    %s36 = scalar_lea.vmem [#allocation2], 8
    %v37 = vld [vmem:[%s36] sm:$0xff]
    %v38 = vadd.f32 %v33, %v37
    %v39 = vmul.f32 %v37, %v37
    %v40 = vadd.f32 %v35, %v39
    %v41 = vmul.f32 %v38, 0.5
    %v42 = vmul.f32 %v40, 0.5
    %v43 = vmul.f32 %v41, %v41
    %v44 = vsub.f32 %v42, %v43
    %v45 = vmax.f32 %v44, 0.0
    %v46 = vadd.f32 %v45, 1e-08
    %v47 = vrsqrt.pop %v46
    %v48 = vmul.f32 %v46, %v47
    %vm49 = vcmp.eq.f32.partialorder %v46, inf
    %v50 = vsel %vm49, %v46, %v48
    %vm51 = vcmp.eq.f32.partialorder %v46, 0.0
    %v52 = vand.u32 %v46, 2147483648
    %v53 = vsel %vm51, %v52, %v50
    %v54 = vld [vmem:[#allocation5] sm:$0x1]
    %v55 = vrot.slane %v53, 4
    %v56 = vadd.f32 %v53, %v55
    %v57 = vrot.slane %v56, 2
    %v58 = vadd.f32 %v56, %v57
    %v59 = vrot.slane %v58, 1
    %v60 = vadd.f32 %v58, %v59
    %v61 = vadd.f32 %v54, %v60
    %62 = vst [vmem:[#allocation5] sm:$0x1] %v61
    // Predicated region
    $region14: #{tpu_custom_call.1} parent=1 // pred_check
      _
    $region15: #{tpu_custom_call.1} parent=1 // pred_check_branch
      %64 = sbr.rel (0) target = $region17
    $region16: #{tpu_custom_call.1} parent=1 // pred_region
      %s66 = ssub.s32 16, 16
      %67 = vsyncadd [#allocation4], %s66
      %s69 = sshll.u32 [#allocation5], 4
      %s70 = int_to_ptr.vmem [resolvable:$true] %s69
      %72 = dma.vmem_to_hbm [thread:$0]  %s70, 16, %s1, [#allocation4]
    $region17: #{tpu_custom_call.1} parent=1 // pred_fallthru
      _
    // Predicated region
    $region18: #{tpu_custom_call.1} parent=1 // pred_check
      _
    $region19: #{tpu_custom_call.1} parent=1 // pred_check_branch
      %74 = sbr.rel (0) target = $region21
    $region20: #{tpu_custom_call.1} parent=1 // pred_region
      %75 = dma.done [#allocation4], 16
    $region21: #{tpu_custom_call.1} parent=1 // pred_fallthru
      _
    %76 = vsyncpa [#allocation3], 1
    %77 = vsyncpa [#allocation4], 1

</llo_original>
